<compile_context>
chip_gen: v5e
topology: v5e:2x2
jax: 0.10.0
libtpu: 0.0.40
codegen_flags: <defaults>
</compile_context>

<pallas_src>
import math
import functools

import jax
import jax.numpy as jnp
from jax.experimental import pallas as pl
from jax.experimental.pallas import tpu as pltpu


# ----------------------------------------------------------------------------
# Buffer construction (plain JAX, deterministic) — matches the torch module.
# ----------------------------------------------------------------------------
def make_pe_table(d_model: int, max_len: int) -> jnp.ndarray:
    """Builds the (max_len, d_model) sinusoidal positional-encoding buffer."""
    position = jnp.arange(max_len, dtype=jnp.float32)[:, None]            # (L, 1)
    div_term = jnp.exp(
        jnp.arange(0, d_model, 2, dtype=jnp.float32)
        * (-math.log(10000.0) / d_model)
    )                                                                      # (D/2,)
    pe = jnp.zeros((max_len, d_model), dtype=jnp.float32)
    pe = pe.at[:, 0::2].set(jnp.sin(position * div_term))
    pe = pe.at[:, 1::2].set(jnp.cos(position * div_term))
    return pe


# ----------------------------------------------------------------------------
# Kernels
# ----------------------------------------------------------------------------
def _broadcast_pe(pe_ref, batch: int) -> jnp.ndarray:
    """(ts, D) pe block -> (ts, B*D) matching the fused-lane x layout."""
    pe_row = pe_ref[...].astype(jnp.float32)
    if batch == 1:
        return pe_row
    return jnp.concatenate([pe_row] * batch, axis=-1)


def _pe_add_kernel(x_ref, pe_ref, o_ref, *, batch: int):
    # Eval / p == 0 path: out = x + pe (broadcast over batch).
    x = x_ref[...].astype(jnp.float32)                 # (ts, B*D)
    o_ref[...] = (x + _broadcast_pe(pe_ref, batch)).astype(o_ref.dtype)


def _pe_add_dropout_kernel(x_ref, pe_ref, u_ref, o_ref, *, batch: int, p: float):
    # Training path: inverted dropout — keep w.p. (1-p), scale kept by 1/(1-p).
    # u_ref holds uniform [0,1) randoms generated in the wrapper.
    # TODO(synk): on real hardware, switch to in-kernel pltpu.prng_seed /
    # prng_random_bits to drop this extra HBM stream (no CPU/interpret lowering).
    x = x_ref[...].astype(jnp.float32)
    y = x + _broadcast_pe(pe_ref, batch)
    keep = u_ref[...] >= jnp.float32(p)
    y = jnp.where(keep, y * jnp.float32(1.0 / (1.0 - p)), jnp.zeros_like(y))
    o_ref[...] = y.astype(o_ref.dtype)


# ----------------------------------------------------------------------------
# Tile selection — ~2 MiB x-blocks keep double-buffered x/u/out + pe well
# under the scoped-VMEM default on every generation (incl. v7x's 64 MiB).
# ----------------------------------------------------------------------------
_TARGET_BLOCK_BYTES = 2 * 1024 * 1024


def _choose_seq_tile(S: int, row_bytes: int, itemsize: int) -> int:
    if S * row_bytes <= _TARGET_BLOCK_BYTES:
        return S                                   # whole array == one block (small inputs)
    sublane = {4: 8, 2: 16, 1: 32}.get(itemsize, 8)
    ts = max(sublane, (_TARGET_BLOCK_BYTES // max(1, row_bytes)) // sublane * sublane)
    return min(ts, S)


# ----------------------------------------------------------------------------
# Wrapper
# ----------------------------------------------------------------------------
def positional_encoding_forward(
    x: jnp.ndarray,              # (S, B, D)
    pe: jnp.ndarray,             # (max_len, D)
    *,
    dropout_p: float = 0.1,
    training: bool = False,      # eval mode => dropout is identity
    rng_key: jax.Array | None = None,
) -> jnp.ndarray:
    S, B, D = x.shape
    assert pe.shape[0] >= S and pe.shape[1] == D

    if training and dropout_p >= 1.0:              # degenerate case: everything dropped
        return jnp.zeros_like(x)

    # Lane-dense layout: fuse batch into the lane axis (free contiguous reshape).
    x2 = x.reshape(S, B * D)
    pe_slice = pe[:S].astype(x.dtype)              # cast once -> halves pe bytes for bf16

    itemsize = jnp.dtype(x.dtype).itemsize
    ts = _choose_seq_tile(S, B * D * itemsize, itemsize)
    grid = (pl.cdiv(S, ts),)                       # ragged last block handled by Pallas

    x_spec = pl.BlockSpec((ts, B * D), lambda i: (i, 0))
    pe_spec = pl.BlockSpec((ts, D), lambda i: (i, 0))
    out_spec = pl.BlockSpec((ts, B * D), lambda i: (i, 0))

    compiler_params = pltpu.CompilerParams(
        # Blocks are independent -> let v7x shard the grid over both TensorCores.
        dimension_semantics=("parallel",),
    )
    out_shape = jax.ShapeDtypeStruct((S, B * D), x.dtype)

    if training and dropout_p > 0.0:
        if rng_key is None:
            rng_key = jax.random.PRNGKey(0)
        u = jax.random.uniform(rng_key, (S, B * D), dtype=jnp.float32)
        kernel = functools.partial(_pe_add_dropout_kernel, batch=B, p=float(dropout_p))
        out2 = pl.pallas_call(
            kernel,
            out_shape=out_shape,
            grid=grid,
            in_specs=[x_spec, pe_spec, x_spec],
            out_specs=out_spec,
            compiler_params=compiler_params,
        )(x2, pe_slice, u)
    else:
        # NOTE: in eval mode this op is pure streaming (1 add / 8 bytes); in a
        # full model it is best fused into the neighboring op instead of paying
        # a standalone read+write of x — kept standalone here as the kernel demo.
        kernel = functools.partial(_pe_add_kernel, batch=B)
        out2 = pl.pallas_call(
            kernel,
            out_shape=out_shape,
            grid=grid,
            in_specs=[x_spec, pe_spec],
            out_specs=out_spec,
            compiler_params=compiler_params,
        )(x2, pe_slice)

    return out2.reshape(S, B, D)


# ----------------------------------------------------------------------------
# Demo / correctness check
# ----------------------------------------------------------------------------
if __name__ == "__main__":
    key = jax.random.PRNGKey(0)

    seq_len, batch, d_model, max_len = 8, 2, 32, 64
    x = jax.random.normal(key, (seq_len, batch, d_model), dtype=jnp.float32)
    pe = make_pe_table(d_model, max_len)

    # --- Eval mode (dropout = identity), matches the torch module in .eval() ---
    out = positional_encoding_forward(x, pe, dropout_p=0.1, training=False)
    out = jax.block_until_ready(out)

    ref = x + pe[:seq_len][:, None, :]
    assert out.shape == (seq_len, batch, d_model)
    assert jnp.allclose(out, ref, atol=1e-6, rtol=1e-6)

    # --- Training mode: exercises the dropout path (deterministic mask) -------
    p = 0.1
    drop_key = jax.random.PRNGKey(42)
    out_train = positional_encoding_forward(
        x, pe, dropout_p=p, training=True, rng_key=drop_key
    )
    out_train = jax.block_until_ready(out_train)

    u = jax.random.uniform(
        drop_key, (seq_len, batch * d_model), dtype=jnp.float32
    ).reshape(seq_len, batch, d_model)
    keep = u >= p
    expected = jnp.where(keep, ref / (1.0 - p), 0.0)
    assert jnp.allclose(out_train, expected, atol=1e-5, rtol=1e-5)

    print("KERNEL_OK")
</pallas_src>

<mosaic_0001>
module attributes {stable_mosaic.version = 11 : i64} {
  func.func @_pe_add_kernel(%arg0: i32, %arg1: memref<8x64xf32, #tpu.memory_space<vmem>>, %arg2: memref<8x32xf32, #tpu.memory_space<vmem>>, %arg3: memref<8x64xf32, #tpu.memory_space<vmem>>) attributes {dimension_semantics = [#tpu.dimension_semantics<parallel>], iteration_bounds = array<i64: 1>, scalar_prefetch = 0 : i64, scratch_operands = 0 : i64, tpu.core_type = #tpu.core_type<tc>, window_params = [{transform_indices = @transform_0, window_bounds = array<i64: 8, 64>}, {transform_indices = @transform_1, window_bounds = array<i64: 8, 32>}, {transform_indices = @transform_2, window_bounds = array<i64: 8, 64>}]} {
    %c0 = arith.constant 0 : index
    %c0_0 = arith.constant 0 : index
    %0 = vector.load %arg1[%c0, %c0_0] : memref<8x64xf32, #tpu.memory_space<vmem>>, vector<8x64xf32>
    %c0_1 = arith.constant 0 : index
    %c0_2 = arith.constant 0 : index
    %1 = vector.load %arg2[%c0_1, %c0_2] : memref<8x32xf32, #tpu.memory_space<vmem>>, vector<8x32xf32>
    %2 = tpu.concatenate %1, %1 in 1 : vector<8x32xf32>, vector<8x32xf32> -> vector<8x64xf32>
    %3 = arith.addf %0, %2 : vector<8x64xf32>
    %c0_3 = arith.constant 0 : index
    %c0_4 = arith.constant 0 : index
    %4 = vector.load %arg3[%c0_3, %c0_4] : memref<8x64xf32, #tpu.memory_space<vmem>>, vector<8x64xf32>
    tpu.vector_store %arg3[%c0_3, %c0_4], %3 {strides = array<i32>} : memref<8x64xf32, #tpu.memory_space<vmem>>, vector<8x64xf32>,
    return
  }
  func.func @transform_0(%arg0: i32) -> (i32, i32) {
    %c0_i32 = arith.constant 0 : i32
    %c0_i32_0 = arith.constant 0 : i32
    return %arg0, %c0_i32 : i32, i32
  }
  func.func @transform_1(%arg0: i32) -> (i32, i32) {
    %c0_i32 = arith.constant 0 : i32
    %c0_i32_0 = arith.constant 0 : i32
    return %arg0, %c0_i32 : i32, i32
  }
  func.func @transform_2(%arg0: i32) -> (i32, i32) {
    %c0_i32 = arith.constant 0 : i32
    %c0_i32_0 = arith.constant 0 : i32
    return %arg0, %c0_i32 : i32, i32
  }
}

</mosaic_0001>

<llo_original>
// kernel: tpu_custom_call.1
$region0: #{tpu_custom_call.1}
  #allocation0 [shape = 'u32[]', space=smem, size = 0x4, offset = 0x4, fixed_abs, tag = 'smem constant byte address 0x4 - core index']
  #allocation1 [shape = 'u32[72,128]{1,0:T(1,128)}', space=vmem, size = 0x9000, scoped, tag = 'internal scratch']
  %s0 = inlined_call_operand.hbm [shape: f32[8,64], index: 0, kind: input, shape index: {}]
  %s1 = inlined_call_operand.hbm [shape: f32[8,32], index: 1, kind: input, shape index: {}]
  %s2 = inlined_call_operand.hbm [shape: f32[8,64], index: 2, kind: output, shape index: {}]
  %s3 = sld [smem:[#allocation0]]
  $region26: #{tpu_custom_call.1} parent=0
    _
  %s5 = ssub.s32 1, %s3
  %s6 = scalar_select 0, %s5, %s3
  $region1: #{tpu_custom_call.1} parent=0
    #allocation2 [shape = 'u8[4096]{0}', space=vmem, size = 0x1000, scoped, tag = 'input window, operand 0, single buffered']
    #allocation3 [shape = 's32[1]{0}', space=sflag, size = 0x4, scoped, tag = 'scoped memory for tpu_custom_call.1']
    #allocation4 [shape = 's32[1]{0}', space=sflag, size = 0x4, scoped, tag = 'scoped memory for tpu_custom_call.1']
    #allocation5 [shape = 'u8[4096]{0}', space=vmem, size = 0x1000, scoped, tag = 'input window, operand 1, single buffered']
    #allocation6 [shape = 's32[1]{0}', space=sflag, size = 0x4, scoped, tag = 'scoped memory for tpu_custom_call.1']
    #allocation7 [shape = 'u8[4096]{0}', space=vmem, size = 0x1000, scoped, tag = 'output window, operand 0, single buffered']
    %7 = vsyncpa [#allocation3], 0
    %8 = vsyncpa [#allocation6], 0
    %9 = vsyncpa [#allocation4], 0
    // Predicated region
    $region2: #{tpu_custom_call.1} parent=1 // pred_check
      _
    $region3: #{tpu_custom_call.1} parent=1 // pred_check_branch
      %11 = sbr.rel (0) target = $region5
    $region4: #{tpu_custom_call.1} parent=1 // pred_region
      %13 = vsyncadd [#allocation3], 0
      %s15 = sshll.u32 %s0, 4
      %s16 = int_to_ptr.hbm [resolvable:$true] %s15
      %s17 = sshll.u32 [#allocation2], 4
      %s18 = int_to_ptr.vmem [resolvable:$true] %s17
      %20 = dma.hbm_to_vmem [thread:$0]  %s16, 128, %s18, [#allocation3]
    $region5: #{tpu_custom_call.1} parent=1 // pred_fallthru
      _
    // Predicated region
    $region6: #{tpu_custom_call.1} parent=1 // pred_check
      _
    $region7: #{tpu_custom_call.1} parent=1 // pred_check_branch
      %22 = sbr.rel (0) target = $region9
    $region8: #{tpu_custom_call.1} parent=1 // pred_region
      %24 = vsyncadd [#allocation6], 0
      %s26 = sshll.u32 %s1, 4
      %s27 = int_to_ptr.hbm [resolvable:$true] %s26
      %s28 = sshll.u32 [#allocation5], 4
      %s29 = int_to_ptr.vmem [resolvable:$true] %s28
      %31 = dma.hbm_to_vmem [thread:$0]  %s27, 128, %s29, [#allocation6]
    $region9: #{tpu_custom_call.1} parent=1 // pred_fallthru
      _
    // Predicated region
    $region10: #{tpu_custom_call.1} parent=1 // pred_check
      _
    $region11: #{tpu_custom_call.1} parent=1 // pred_check_branch
      %33 = sbr.rel (0) target = $region13
    $region12: #{tpu_custom_call.1} parent=1 // pred_region
      %35 = dma.done [#allocation3], 128
    $region13: #{tpu_custom_call.1} parent=1 // pred_fallthru
      _
    // Predicated region
    $region14: #{tpu_custom_call.1} parent=1 // pred_check
      _
    $region15: #{tpu_custom_call.1} parent=1 // pred_check_branch
      %37 = sbr.rel (0) target = $region17
    $region16: #{tpu_custom_call.1} parent=1 // pred_region
      %39 = dma.done [#allocation6], 128
    $region17: #{tpu_custom_call.1} parent=1 // pred_fallthru
      _
    %v40 = vld [vmem:[#allocation2] sm:$0xff]
    %v41 = vld [vmem:[#allocation5] sm:$0xff]
    %43 = vrot.lane.b32.xlu0 %v41, 32
    %v44 = vpop.permute.xlu0 %43
    %vm46 = vcmask 261120
    %v47 = vsel %vm46, %v41, %v44
    %v48 = vadd.f32 %v40, %v47
    %vm49 = vcmask 523264
    %50 = vst.msk [vmem:[#allocation7] sm:$0xff] %vm49, %v48
    // Predicated region
    $region18: #{tpu_custom_call.1} parent=1 // pred_check
      _
    $region19: #{tpu_custom_call.1} parent=1 // pred_check_branch
      %52 = sbr.rel (0) target = $region21
    $region20: #{tpu_custom_call.1} parent=1 // pred_region
      %54 = vsyncadd [#allocation4], 0
      %s56 = sshll.u32 [#allocation7], 4
      %s57 = int_to_ptr.vmem [resolvable:$true] %s56
      %s58 = sshll.u32 %s2, 4
      %s59 = int_to_ptr.hbm [resolvable:$true] %s58
      %61 = dma.vmem_to_hbm [thread:$0]  %s57, 128, %s59, [#allocation4]
    $region21: #{tpu_custom_call.1} parent=1 // pred_fallthru
      _
    // Predicated region
    $region22: #{tpu_custom_call.1} parent=1 // pred_check
      _
    $region23: #{tpu_custom_call.1} parent=1 // pred_check_branch
      %63 = sbr.rel (0) target = $region25
    $region24: #{tpu_custom_call.1} parent=1 // pred_region
      %65 = dma.done [#allocation4], 128
    $region25: #{tpu_custom_call.1} parent=1 // pred_fallthru
      _
    %66 = vsyncpa [#allocation3], 1
    %67 = vsyncpa [#allocation6], 1
    %68 = vsyncpa [#allocation4], 1

</llo_original>
